<compile_context>
chip_gen: v7x
topology: tpu7x:2x2x1
jax: 0.10.0
libtpu: 0.0.40
codegen_flags: <defaults>
</compile_context>

<pallas_src>
import jax
import jax.numpy as jnp
from jax.experimental import pallas as pl
from jax.experimental.pallas import tpu as pltpu

# ---- problem sizes (small, synthetic) ----
B = 8             # batch
DIM1 = 32         # features of x1 (vector_dim of head1)
DIM2 = 48         # features of x2 (vector_dim of head2)
D_TOTAL = DIM1 + DIM2
OUT_UNITS = 1     # DATA_TYPE == 'simple'  ->  Linear(dim, 1)


def late_kernel(x_ref, w_ref, scal_ref, out_ref):
    # Scalar slab (SMEM): [b1, b2, w0/(w0+w1), w1/(w0+w1)]  (pre-normalized on host)
    b1 = scal_ref[0]
    b2 = scal_ref[1]
    wa = scal_ref[2]
    wb = scal_ref[3]

    x = x_ref[...]                    # (B, D_TOTAL)  f32
    w = w_ref[...]                    # (1, D_TOTAL)  f32, broadcast row
    prod = x * w                      # VPU elementwise: one vreg of work

    # Segmented lane reduction: lanes [0, DIM1) -> head1, [DIM1, D_TOTAL) -> head2
    lane = jax.lax.broadcasted_iota(jnp.int32, prod.shape, dimension=1)
    in_h1 = lane < DIM1
    h1 = jnp.sum(jnp.where(in_h1, prod, 0.0), axis=-1, keepdims=True) + b1
    h2 = jnp.sum(jnp.where(in_h1, 0.0, prod), axis=-1, keepdims=True) + b2

    # act = Sigmoid (DATA_TYPE == 'simple') -> EUP
    s1 = jax.nn.sigmoid(h1)
    s2 = jax.nn.sigmoid(h2)

    # Mix weights already normalized; just scale + add.
    out_ref[...] = (wa * s1 + wb * s2).astype(out_ref.dtype)


def prepare_params(w1, b1, w2, b2, mix_weight):
    """One-time packing of constant eval-mode parameters (hoisted off the call path)."""
    # Lane-major weight row: lanes [0, DIM1) = head1, [DIM1, D_TOTAL) = head2.
    w_row = jnp.concatenate([w1.reshape(-1), w2.reshape(-1)]).astype(jnp.float32)
    w_row = w_row.reshape(1, D_TOTAL)
    # Pre-normalize the mix weights so the kernel does no divide.
    wsum = mix_weight[0] + mix_weight[1]
    scal = jnp.stack([b1[0], b2[0],
                      mix_weight[0] / wsum,
                      mix_weight[1] / wsum]).astype(jnp.float32)     # (4,)
    return w_row, scal


@jax.jit
def late_forward(x1, x2, w_row, scal):
    """x1: (B, DIM1), x2: (B, DIM2); w_row: (1, DIM1+DIM2); scal: (4,)."""
    # Single fused activation slab (one operand, one DMA inside the kernel).
    x = jnp.concatenate([x1, x2], axis=-1).astype(jnp.float32)       # (B, D_TOTAL)
    return pl.pallas_call(
        late_kernel,
        out_shape=jax.ShapeDtypeStruct((x.shape[0], OUT_UNITS), jnp.float32),
        in_specs=[
            pl.BlockSpec(memory_space=pltpu.MemorySpace.VMEM),   # x slab
            pl.BlockSpec(memory_space=pltpu.MemorySpace.VMEM),   # weight row
            pl.BlockSpec(memory_space=pltpu.MemorySpace.SMEM),   # scalar slab
        ],
        out_specs=pl.BlockSpec(memory_space=pltpu.MemorySpace.VMEM),
    )(x, w_row, scal)


def reference_forward(x1, x2, w1, b1, w2, b2, mix_weight):
    """Pure-JAX reference mirroring Late (eval mode, 'simple', no aux head)."""
    s1 = jax.nn.sigmoid(x1 @ w1 + b1)
    s2 = jax.nn.sigmoid(x2 @ w2 + b2)
    wsum = mix_weight[0] + mix_weight[1]
    return mix_weight[0] / wsum * s1 + mix_weight[1] / wsum * s2


def make_params(key):
    ks = jax.random.split(key, 3)

    def lin(k, fan_in, fan_out):
        bound = 1.0 / jnp.sqrt(fan_in)
        kw, kb = jax.random.split(k)
        w = jax.random.uniform(kw, (fan_in, fan_out), jnp.float32, -bound, bound)
        b = jax.random.uniform(kb, (fan_out,), jnp.float32, -bound, bound)
        return w, b

    w1, b1 = lin(ks[0], DIM1, OUT_UNITS)       # head1.fc Linear
    w2, b2 = lin(ks[1], DIM2, OUT_UNITS)       # head2.fc Linear
    mix = jax.random.uniform(ks[2], (2,), jnp.float32)   # torch.rand(2) parameter
    return w1, b1, w2, b2, mix


if __name__ == "__main__":
    key = jax.random.PRNGKey(0)
    k1, k2, kp = jax.random.split(key, 3)
    x1 = jax.random.normal(k1, (B, DIM1), jnp.float32)
    x2 = jax.random.normal(k2, (B, DIM2), jnp.float32)
    w1, b1, w2, b2, mix = make_params(kp)

    # Parameter packing done once (constant eval-mode weights).
    w_row, scal = prepare_params(w1, b1, w2, b2, mix)

    out = jax.block_until_ready(late_forward(x1, x2, w_row, scal))
    ref = jax.block_until_ready(reference_forward(x1, x2, w1, b1, w2, b2, mix))

    assert out.shape == (B, OUT_UNITS)
    assert jnp.allclose(out, ref, atol=1e-5, rtol=1e-5), "mismatch vs reference"
    # TODO(synk): Softmax activation / 3-class output / aux-head branches are
    # config-off (DATA_TYPE='simple', REQUIRE_AUX=False) and not emitted here.
    print("KERNEL_OK")
</pallas_src>

<mosaic_0001>
module attributes {stable_mosaic.version = 11 : i64} {
  func.func @late_kernel(%arg0: memref<8x80xf32, #tpu.memory_space<vmem>>, %arg1: memref<1x80xf32, #tpu.memory_space<vmem>>, %arg2: memref<4xf32, #tpu.memory_space<smem>>, %arg3: memref<8x1xf32, #tpu.memory_space<vmem>>) attributes {dimension_semantics = [], scalar_prefetch = 0 : i64, scratch_operands = 0 : i64, tpu.core_type = #tpu.core_type<tc>} {
    %c0 = arith.constant 0 : index
    %0 = memref.load %arg2[%c0] : memref<4xf32, #tpu.memory_space<smem>>
    %c1 = arith.constant 1 : index
    %1 = memref.load %arg2[%c1] : memref<4xf32, #tpu.memory_space<smem>>
    %c2 = arith.constant 2 : index
    %2 = memref.load %arg2[%c2] : memref<4xf32, #tpu.memory_space<smem>>
    %c3 = arith.constant 3 : index
    %3 = memref.load %arg2[%c3] : memref<4xf32, #tpu.memory_space<smem>>
    %c0_0 = arith.constant 0 : index
    %c0_1 = arith.constant 0 : index
    %4 = vector.load %arg0[%c0_0, %c0_1] : memref<8x80xf32, #tpu.memory_space<vmem>>, vector<8x80xf32>
    %c0_2 = arith.constant 0 : index
    %c0_3 = arith.constant 0 : index
    %5 = vector.load %arg1[%c0_2, %c0_3] : memref<1x80xf32, #tpu.memory_space<vmem>>, vector<1x80xf32>
    %6 = vector.broadcast %5 : vector<1x80xf32> to vector<8x80xf32>
    %7 = arith.mulf %4, %6 : vector<8x80xf32>
    %8 = tpu.iota {dimensions = array<i32: 1>} : vector<8x80xi32>
    %c32_i32 = arith.constant 32 : i32
    %9 = vector.broadcast %c32_i32 : i32 to vector<8x80xi32>
    %10 = arith.cmpi slt, %8, %9 : vector<8x80xi32>
    %cst = arith.constant 0.000000e+00 : f32
    %11 = vector.broadcast %cst : f32 to vector<8x80xf32>
    %12 = arith.select %10, %7, %11 : vector<8x80xi1>, vector<8x80xf32>
    %cst_4 = arith.constant dense<0.000000e+00> : vector<8xf32>
    %13 = vector.multi_reduction <add>, %12, %cst_4 [1] : vector<8x80xf32> to vector<8xf32>
    %14 = vector.shape_cast %13 : vector<8xf32> to vector<8x1xf32>
    %15 = vector.broadcast %0 : f32 to vector<8x1xf32>
    %16 = arith.addf %14, %15 : vector<8x1xf32>
    %cst_5 = arith.constant 0.000000e+00 : f32
    %17 = vector.broadcast %cst_5 : f32 to vector<8x80xf32>
    %18 = arith.select %10, %17, %7 : vector<8x80xi1>, vector<8x80xf32>
    %cst_6 = arith.constant dense<0.000000e+00> : vector<8xf32>
    %19 = vector.multi_reduction <add>, %18, %cst_6 [1] : vector<8x80xf32> to vector<8xf32>
    %20 = vector.shape_cast %19 : vector<8xf32> to vector<8x1xf32>
    %21 = vector.broadcast %1 : f32 to vector<8x1xf32>
    %22 = arith.addf %20, %21 : vector<8x1xf32>
    %23 = arith.negf %16 : vector<8x1xf32>
    %24 = math.exp %23 : vector<8x1xf32>
    %cst_7 = arith.constant 1.000000e+00 : f32
    %25 = vector.broadcast %cst_7 : f32 to vector<8x1xf32>
    %26 = arith.addf %25, %24 : vector<8x1xf32>
    %27 = arith.divf %25, %26 : vector<8x1xf32>
    %28 = arith.negf %22 : vector<8x1xf32>
    %29 = math.exp %28 : vector<8x1xf32>
    %cst_8 = arith.constant 1.000000e+00 : f32
    %30 = vector.broadcast %cst_8 : f32 to vector<8x1xf32>
    %31 = arith.addf %30, %29 : vector<8x1xf32>
    %32 = arith.divf %30, %31 : vector<8x1xf32>
    %33 = vector.broadcast %2 : f32 to vector<8x1xf32>
    %34 = arith.mulf %33, %27 : vector<8x1xf32>
    %35 = vector.broadcast %3 : f32 to vector<8x1xf32>
    %36 = arith.mulf %35, %32 : vector<8x1xf32>
    %37 = arith.addf %34, %36 : vector<8x1xf32>
    %c0_9 = arith.constant 0 : index
    %c0_10 = arith.constant 0 : index
    %38 = vector.load %arg3[%c0_9, %c0_10] : memref<8x1xf32, #tpu.memory_space<vmem>>, vector<8x1xf32>
    tpu.vector_store %arg3[%c0_9, %c0_10], %37 {strides = array<i32>} : memref<8x1xf32, #tpu.memory_space<vmem>>, vector<8x1xf32>,
    return
  }
}

</mosaic_0001>

<llo_original>
// kernel: late_forward.1
$region0: #{late_forward.1}
  #allocation0 [shape = 'u32[]', space=smem, size = 0x4, offset = 0x4, fixed_abs, tag = 'smem constant byte address 0x4 - core index']
  #allocation1 [shape = 'u32[144,128]{1,0:T(1,128)}', space=vmem, size = 0x12000, scoped, tag = 'internal scratch']
  %s0 = inlined_call_operand.vmem [shape: f32[8,80], index: 0, kind: input, shape index: {}]
  %s1 = inlined_call_operand.vmem [shape: f32[1,80], index: 1, kind: input, shape index: {}]
  %s2 = inlined_call_operand.vmem [shape: f32[4], index: 2, kind: input, shape index: {}]
  %s3 = inlined_call_operand.vmem [shape: f32[8,1], index: 3, kind: output, shape index: {}]
  %s4 = sld [smem:[#allocation0]]
  $region26: #{late_forward.1} parent=0
    _
  %s6 = ssub.s32 1, %s4
  %s7 = scalar_select 0, %s6, %s4
  $region1: #{late_forward.1} parent=0
    #allocation2 [shape = 'u8[512]{0}', space=smem, size = 0x200, scoped, tag = 'input window, operand 2, single buffered']
    #allocation3 [shape = 's32[1]{0}', space=sflag, size = 0x4, scoped, tag = 'scoped memory for late_forward.1']
    %8 = vsyncpa [#allocation3], 0
    // Predicated region
    $region2: #{late_forward.1} parent=1 // pred_check
      _
    $region3: #{late_forward.1} parent=1 // pred_check_branch
      %10 = sbr.rel (0) target = $region5
    $region4: #{late_forward.1} parent=1 // pred_region
      _
    $region5: #{late_forward.1} parent=1 // pred_fallthru
      _
    // Predicated region
    $region6: #{late_forward.1} parent=1 // pred_check
      _
    $region7: #{late_forward.1} parent=1 // pred_check_branch
      %12 = sbr.rel (0) target = $region9
    $region8: #{late_forward.1} parent=1 // pred_region
      _
    $region9: #{late_forward.1} parent=1 // pred_fallthru
      _
    // Predicated region
    $region10: #{late_forward.1} parent=1 // pred_check
      _
    $region11: #{late_forward.1} parent=1 // pred_check_branch
      %14 = sbr.rel (0) target = $region13
    $region12: #{late_forward.1} parent=1 // pred_region
      %s16 = ssub.s32 16, 16
      %17 = vsyncadd [#allocation3], %s16
      %s19 = sshll.u32 %s2, 4
      %s20 = int_to_ptr.vmem [resolvable:$true] %s19
      %22 = dma.vmem_to_smem %s20, 16, [#allocation2], [#allocation3]
    $region13: #{late_forward.1} parent=1 // pred_fallthru
      _
    // Predicated region
    $region14: #{late_forward.1} parent=1 // pred_check
      _
    $region15: #{late_forward.1} parent=1 // pred_check_branch
      %24 = sbr.rel (0) target = $region17
    $region16: #{late_forward.1} parent=1 // pred_region
      %25 = dma.done [#allocation3], 16
    $region17: #{late_forward.1} parent=1 // pred_fallthru
      _
    %26 = sfence
    %s27 = sld [smem:[#allocation2]]
    %s28 = sld [smem:[#allocation2 + $0x1]]
    %s29 = sld [smem:[#allocation2 + $0x2]]
    %s30 = sld [smem:[#allocation2 + $0x3]]
    %v31 = vld [vmem:[%s0] sm:$0xff]
    %v32 = vld [vmem:[%s1] sm:$0x1]
    %v34 = vlaneseq
    %v35 = vshrl.u32 %v34, 7
    %v36 = vsub.s32 0, %v35
    %v37 = vrot.slane %v32, %v36
    %v39 = vmul.f32 %v31, %v37
    %v40 = vlaneseq
    %v41 = vand.u32 %v40, 127
    %vm42 = vcmp.lt.s32.totalorder %v41, 32
    %v43 = vsel %vm42, %v39, 0.0
    %vm44 = vcmask 654336
    %v45 = vsel %vm44, %v43, 0.0
    %46 = vadd.xlane.f32.xlu0 %v45
    %v47 = vpop.xlane.xlu0 %46
    %v48 = vstv %s27
    %v49 = vadd.f32 %v47, %v48
    %v50 = vsel %vm42, 0.0, %v39
    %v51 = vsel %vm44, %v50, 0.0
    %52 = vadd.xlane.f32.xlu0 %v51
    %v53 = vpop.xlane.xlu0 %52
    %v54 = vstv %s28
    %v55 = vadd.f32 %v53, %v54
    %v56 = vxor.u32 %v49, 2147483648
    %v57 = vmul.f32 %v56, 1.442695
    %v58 = vpow.pop %v57
    %v59 = vadd.f32 %v58, 1.0
    %v60 = vrcp.pop %v59
    %v61 = vmul.f32 1.0, %v60
    %v62 = vxor.u32 %v55, 2147483648
    %v63 = vmul.f32 %v62, 1.442695
    %v64 = vpow.pop %v63
    %v65 = vadd.f32 %v64, 1.0
    %v66 = vrcp.pop %v65
    %v67 = vmul.f32 1.0, %v66
    %v68 = vstv %s29
    %v69 = vmul.f32 %v68, %v61
    %v70 = vstv %s30
    %v71 = vmul.f32 %v70, %v67
    %v72 = vadd.f32 %v69, %v71
    %vm73 = vcmask 7168
    %74 = vst.msk [vmem:[%s3] sm:$0xff] %vm73, %v72
    // Predicated region
    $region18: #{late_forward.1} parent=1 // pred_check
      _
    $region19: #{late_forward.1} parent=1 // pred_check_branch
      %76 = sbr.rel (0) target = $region21
    $region20: #{late_forward.1} parent=1 // pred_region
      _
    $region21: #{late_forward.1} parent=1 // pred_fallthru
      _
    // Predicated region
    $region22: #{late_forward.1} parent=1 // pred_check
      _
    $region23: #{late_forward.1} parent=1 // pred_check_branch
      %78 = sbr.rel (0) target = $region25
    $region24: #{late_forward.1} parent=1 // pred_region
      _
    $region25: #{late_forward.1} parent=1 // pred_fallthru
      _
    %79 = vsyncpa [#allocation3], 1

</llo_original>
